<compile_context>
chip_gen: v6e
topology: v6e:2x2x1
jax: 0.10.0
libtpu: 0.0.40
codegen_flags: <defaults>
</compile_context>

<pallas_src>
import jax
import jax.numpy as jnp
from jax.experimental import pallas as pl
from jax.experimental.pallas import tpu as pltpu

SUBLANE = 8
DEFAULT_TILE_M = 4096          # large batch tile: amortizes ~0.35 us/step grid overhead
MIN_ROWS_FOR_CORE_SPLIT = 1024  # split into >=2 grid steps above this (v7x megacore)


def _round_up(x, m):
    return ((x + m - 1) // m) * m


def mlp_kernel(x_ref, w1_ref, b1_ref, w2_ref, b2_ref, w3_ref, b3_ref, o_ref):
    # Layer 1 (input affine already folded into w1/b1) + ReLU
    h1 = jnp.dot(x_ref[...], w1_ref[...], preferred_element_type=jnp.float32)
    h1 = jnp.maximum(h1 + b1_ref[...], 0.0)
    # Layer 2 + ReLU
    h2 = jnp.dot(h1, w2_ref[...], preferred_element_type=jnp.float32)
    h2 = jnp.maximum(h2 + b2_ref[...], 0.0)
    # Layer 3 (real output width, no lane padding) + sigmoid
    logits = jnp.dot(h2, w3_ref[...], preferred_element_type=jnp.float32)
    o_ref[...] = jax.nn.sigmoid(logits + b3_ref[...])


def _fold_input_affine(params):
    """Fold `2*x - 1` into layer 1: (2x-1)@W1 + b1 == x@(2*W1) + (b1 - sum_rows(W1))."""
    w1, b1 = params["ln1"]
    w2, b2 = params["ln2"]
    w3, b3 = params["ln3"]
    w1f = 2.0 * w1
    b1f = b1 - jnp.sum(w1, axis=0, keepdims=True)
    return w1f, b1f, w2, b2, w3, b3


def net_forward(x, params, *, tile_m=DEFAULT_TILE_M):
    """x: (batch, input_size) float32. params: dict of (W, b) per layer with
    W stored as (in, out) and b as (1, out)."""
    w1, b1, w2, b2, w3, b3 = _fold_input_affine(params)
    batch, in_features = x.shape
    hidden = w1.shape[1]
    out_features = w3.shape[1]

    # Tile selection:
    #  * batch rounded only up to the sublane multiple (<= 7 padded rows)
    #  * n_tiles chosen so each tile <= tile_m; forced to >= 2 for large batches
    #    so the "parallel" grid axis shards across both v7x TensorCores
    #  * tm = round_up(cdiv(rows, n_tiles), 8) keeps intra-grid padding minimal
    padded8 = _round_up(max(batch, SUBLANE), SUBLANE)
    n_tiles = pl.cdiv(padded8, tile_m)
    if n_tiles == 1 and padded8 >= MIN_ROWS_FOR_CORE_SPLIT:
        n_tiles = 2
    tm = _round_up(pl.cdiv(padded8, n_tiles), SUBLANE)
    total_rows = tm * n_tiles
    if total_rows != batch:
        x = jnp.pad(x, ((0, total_rows - batch), (0, 0)))
    grid = (n_tiles,)

    def const_spec(shape):
        # Weights/biases: same block every grid step -> stay resident in VMEM.
        return pl.BlockSpec(shape, lambda i: (0, 0))

    cost = pl.CostEstimate(
        flops=2 * total_rows * (in_features * hidden + hidden * hidden + hidden * out_features),
        transcendentals=total_rows * out_features,  # sigmoid
        bytes_accessed=4 * (total_rows * (in_features + out_features)
                            + w1.size + b1.size + w2.size + b2.size + w3.size + b3.size),
    )

    out = pl.pallas_call(
        mlp_kernel,
        out_shape=jax.ShapeDtypeStruct((total_rows, out_features), jnp.float32),
        grid=grid,
        in_specs=[
            pl.BlockSpec((tm, in_features), lambda i: (i, 0)),  # x: tiled over batch
            const_spec(w1.shape), const_spec(b1.shape),
            const_spec(w2.shape), const_spec(b2.shape),
            const_spec(w3.shape), const_spec(b3.shape),
        ],
        out_specs=pl.BlockSpec((tm, out_features), lambda i: (i, 0)),
        compiler_params=pltpu.CompilerParams(
            dimension_semantics=("parallel",),  # megacore sharding on v7x
        ),
        cost_estimate=cost,
    )(x, w1, b1, w2, b2, w3, b3)

    if total_rows != batch:
        out = out[:batch]
    return out


def init_params(key, input_size, output_size):
    """Deterministic init mimicking nn.Linear shapes (U(-1/sqrt(fan_in), +...))."""
    def linear(key, fan_in, fan_out):
        kw, kb = jax.random.split(key)
        bound = 1.0 / jnp.sqrt(jnp.float32(fan_in))
        # Stored directly as (in, out) = W.T relative to PyTorch's (out, in).
        w = jax.random.uniform(kw, (fan_in, fan_out), jnp.float32, -bound, bound)
        b = jax.random.uniform(kb, (1, fan_out), jnp.float32, -bound, bound)
        return w, b

    k1, k2, k3 = jax.random.split(key, 3)
    return {
        "ln1": linear(k1, input_size, 16),
        "ln2": linear(k2, 16, 16),
        "ln3": linear(k3, 16, output_size),
    }


if __name__ == "__main__":
    key = jax.random.PRNGKey(0)
    k_params, k_x = jax.random.split(key)

    batch = 8
    input_size = 32
    output_size = 4

    params = init_params(k_params, input_size, output_size)
    x = jax.random.uniform(k_x, (batch, input_size), jnp.float32)

    out = net_forward(x, params)
    out = jax.block_until_ready(out)

    # Reference check in plain JAX (original, unfolded math).
    def ref(x, params):
        w1, b1 = params["ln1"]
        w2, b2 = params["ln2"]
        w3, b3 = params["ln3"]
        h = 2.0 * x - 1.0
        h = jnp.maximum(h @ w1 + b1, 0.0)
        h = jnp.maximum(h @ w2 + b2, 0.0)
        return jax.nn.sigmoid(h @ w3 + b3)

    expected = ref(x, params)
    assert out.shape == (batch, output_size)
    assert jnp.allclose(out, expected, atol=1e-4, rtol=1e-4)

    print("KERNEL_OK")
</pallas_src>

<mosaic_0001>
module attributes {stable_mosaic.version = 11 : i64} {
  func.func @mlp_kernel(%arg0: i32, %arg1: memref<8x32xf32, #tpu.memory_space<vmem>>, %arg2: memref<32x16xf32, #tpu.memory_space<vmem>>, %arg3: memref<1x16xf32, #tpu.memory_space<vmem>>, %arg4: memref<16x16xf32, #tpu.memory_space<vmem>>, %arg5: memref<1x16xf32, #tpu.memory_space<vmem>>, %arg6: memref<16x4xf32, #tpu.memory_space<vmem>>, %arg7: memref<1x4xf32, #tpu.memory_space<vmem>>, %arg8: memref<8x4xf32, #tpu.memory_space<vmem>>) attributes {dimension_semantics = [#tpu.dimension_semantics<parallel>], iteration_bounds = array<i64: 1>, scalar_prefetch = 0 : i64, scratch_operands = 0 : i64, tpu.core_type = #tpu.core_type<tc>, window_params = [{transform_indices = @transform_0, window_bounds = array<i64: 8, 32>}, {pipeline_mode = #tpu.pipeline_mode<synchronous>, transform_indices = @transform_1, window_bounds = array<i64: 32, 16>}, {pipeline_mode = #tpu.pipeline_mode<synchronous>, transform_indices = @transform_2, window_bounds = array<i64: 1, 16>}, {pipeline_mode = #tpu.pipeline_mode<synchronous>, transform_indices = @transform_3, window_bounds = array<i64: 16, 16>}, {pipeline_mode = #tpu.pipeline_mode<synchronous>, transform_indices = @transform_4, window_bounds = array<i64: 1, 16>}, {pipeline_mode = #tpu.pipeline_mode<synchronous>, transform_indices = @transform_5, window_bounds = array<i64: 16, 4>}, {pipeline_mode = #tpu.pipeline_mode<synchronous>, transform_indices = @transform_6, window_bounds = array<i64: 1, 4>}, {transform_indices = @transform_7, window_bounds = array<i64: 8, 4>}]} {
    %c0 = arith.constant 0 : index
    %c0_0 = arith.constant 0 : index
    %0 = vector.load %arg1[%c0, %c0_0] : memref<8x32xf32, #tpu.memory_space<vmem>>, vector<8x32xf32>
    %c0_1 = arith.constant 0 : index
    %c0_2 = arith.constant 0 : index
    %1 = vector.load %arg2[%c0_1, %c0_2] : memref<32x16xf32, #tpu.memory_space<vmem>>, vector<32x16xf32>
    %cst = arith.constant dense<0.000000e+00> : vector<8x16xf32>
    %2 = tpu.matmul %0, %1, %cst {dimension_numbers = #tpu.dot_dimension_numbers<[1], [0], [0], [1], [0, 0, 1, 1], [], []>} : vector<8x32xf32>, vector<32x16xf32>, vector<8x16xf32> -> vector<8x16xf32>
    %c0_3 = arith.constant 0 : index
    %c0_4 = arith.constant 0 : index
    %3 = vector.load %arg3[%c0_3, %c0_4] : memref<1x16xf32, #tpu.memory_space<vmem>>, vector<1x16xf32>
    %4 = vector.broadcast %3 : vector<1x16xf32> to vector<8x16xf32>
    %5 = arith.addf %2, %4 : vector<8x16xf32>
    %cst_5 = arith.constant 0.000000e+00 : f32
    %6 = vector.broadcast %cst_5 : f32 to vector<8x16xf32>
    %7 = arith.maximumf %5, %6 : vector<8x16xf32>
    %c0_6 = arith.constant 0 : index
    %c0_7 = arith.constant 0 : index
    %8 = vector.load %arg4[%c0_6, %c0_7] : memref<16x16xf32, #tpu.memory_space<vmem>>, vector<16x16xf32>
    %cst_8 = arith.constant dense<0.000000e+00> : vector<8x16xf32>
    %9 = tpu.matmul %7, %8, %cst_8 {dimension_numbers = #tpu.dot_dimension_numbers<[1], [0], [0], [1], [0, 0, 1, 1], [], []>} : vector<8x16xf32>, vector<16x16xf32>, vector<8x16xf32> -> vector<8x16xf32>
    %c0_9 = arith.constant 0 : index
    %c0_10 = arith.constant 0 : index
    %10 = vector.load %arg5[%c0_9, %c0_10] : memref<1x16xf32, #tpu.memory_space<vmem>>, vector<1x16xf32>
    %11 = vector.broadcast %10 : vector<1x16xf32> to vector<8x16xf32>
    %12 = arith.addf %9, %11 : vector<8x16xf32>
    %cst_11 = arith.constant 0.000000e+00 : f32
    %13 = vector.broadcast %cst_11 : f32 to vector<8x16xf32>
    %14 = arith.maximumf %12, %13 : vector<8x16xf32>
    %c0_12 = arith.constant 0 : index
    %c0_13 = arith.constant 0 : index
    %15 = vector.load %arg6[%c0_12, %c0_13] : memref<16x4xf32, #tpu.memory_space<vmem>>, vector<16x4xf32>
    %cst_14 = arith.constant dense<0.000000e+00> : vector<8x4xf32>
    %16 = tpu.matmul %14, %15, %cst_14 {dimension_numbers = #tpu.dot_dimension_numbers<[1], [0], [0], [1], [0, 0, 1, 1], [], []>} : vector<8x16xf32>, vector<16x4xf32>, vector<8x4xf32> -> vector<8x4xf32>
    %c0_15 = arith.constant 0 : index
    %c0_16 = arith.constant 0 : index
    %17 = vector.load %arg7[%c0_15, %c0_16] : memref<1x4xf32, #tpu.memory_space<vmem>>, vector<1x4xf32>
    %18 = vector.broadcast %17 : vector<1x4xf32> to vector<8x4xf32>
    %19 = arith.addf %16, %18 : vector<8x4xf32>
    %20 = arith.negf %19 : vector<8x4xf32>
    %21 = math.exp %20 : vector<8x4xf32>
    %cst_17 = arith.constant 1.000000e+00 : f32
    %22 = vector.broadcast %cst_17 : f32 to vector<8x4xf32>
    %23 = arith.addf %22, %21 : vector<8x4xf32>
    %24 = arith.divf %22, %23 : vector<8x4xf32>
    %c0_18 = arith.constant 0 : index
    %c0_19 = arith.constant 0 : index
    %25 = vector.load %arg8[%c0_18, %c0_19] : memref<8x4xf32, #tpu.memory_space<vmem>>, vector<8x4xf32>
    tpu.vector_store %arg8[%c0_18, %c0_19], %24 {strides = array<i32>} : memref<8x4xf32, #tpu.memory_space<vmem>>, vector<8x4xf32>,
    return
  }
  func.func @transform_0(%arg0: i32) -> (i32, i32) {
    %c0_i32 = arith.constant 0 : i32
    %c0_i32_0 = arith.constant 0 : i32
    return %arg0, %c0_i32 : i32, i32
  }
  func.func @transform_1(%arg0: i32) -> (i32, i32) {
    %c0_i32 = arith.constant 0 : i32
    %c0_i32_0 = arith.constant 0 : i32
    %c0_i32_1 = arith.constant 0 : i32
    return %c0_i32, %c0_i32_0 : i32, i32
  }
  func.func @transform_2(%arg0: i32) -> (i32, i32) {
    %c0_i32 = arith.constant 0 : i32
    %c0_i32_0 = arith.constant 0 : i32
    %c0_i32_1 = arith.constant 0 : i32
    return %c0_i32, %c0_i32_0 : i32, i32
  }
  func.func @transform_3(%arg0: i32) -> (i32, i32) {
    %c0_i32 = arith.constant 0 : i32
    %c0_i32_0 = arith.constant 0 : i32
    %c0_i32_1 = arith.constant 0 : i32
    return %c0_i32, %c0_i32_0 : i32, i32
  }
  func.func @transform_4(%arg0: i32) -> (i32, i32) {
    %c0_i32 = arith.constant 0 : i32
    %c0_i32_0 = arith.constant 0 : i32
    %c0_i32_1 = arith.constant 0 : i32
    return %c0_i32, %c0_i32_0 : i32, i32
  }
  func.func @transform_5(%arg0: i32) -> (i32, i32) {
    %c0_i32 = arith.constant 0 : i32
    %c0_i32_0 = arith.constant 0 : i32
    %c0_i32_1 = arith.constant 0 : i32
    return %c0_i32, %c0_i32_0 : i32, i32
  }
  func.func @transform_6(%arg0: i32) -> (i32, i32) {
    %c0_i32 = arith.constant 0 : i32
    %c0_i32_0 = arith.constant 0 : i32
    %c0_i32_1 = arith.constant 0 : i32
    return %c0_i32, %c0_i32_0 : i32, i32
  }
  func.func @transform_7(%arg0: i32) -> (i32, i32) {
    %c0_i32 = arith.constant 0 : i32
    %c0_i32_0 = arith.constant 0 : i32
    return %arg0, %c0_i32 : i32, i32
  }
}

</mosaic_0001>

<llo_original>
// kernel: tpu_custom_call.1
$region0: #{tpu_custom_call.1}
  #allocation0 [shape = 'u32[]', space=smem, size = 0x4, offset = 0x4, fixed_abs, tag = 'smem constant byte address 0x4 - core index']
  #allocation1 [shape = 'u32[144,128]{1,0:T(1,128)}', space=vmem, size = 0x12000, scoped, tag = 'internal scratch']
  %s0 = inlined_call_operand.vmem [shape: f32[8,32], index: 0, kind: input, shape index: {}]
  %s1 = inlined_call_operand.vmem [shape: f32[32,16], index: 1, kind: input, shape index: {}]
  %s2 = inlined_call_operand.vmem [shape: f32[1,16], index: 2, kind: input, shape index: {}]
  %s3 = inlined_call_operand.vmem [shape: f32[16,16], index: 3, kind: input, shape index: {}]
  %s4 = inlined_call_operand.vmem [shape: f32[1,16], index: 4, kind: input, shape index: {}]
  %s5 = inlined_call_operand.vmem [shape: f32[16,4], index: 5, kind: input, shape index: {}]
  %s6 = inlined_call_operand.vmem [shape: f32[1,4], index: 6, kind: input, shape index: {}]
  %s7 = inlined_call_operand.vmem [shape: f32[8,4], index: 7, kind: output, shape index: {}]
  %s8 = sld [smem:[#allocation0]]
  $region38: #{tpu_custom_call.1} parent=0
    _
  %s10 = ssub.s32 1, %s8
  %s11 = scalar_select 0, %s10, %s8
  // Predicated region
  $region2: #{tpu_custom_call.1} parent=0 // pred_check
    _
  $region3: #{tpu_custom_call.1} parent=0 // pred_check_branch
    %13 = sbr.rel (0) target = $region5
  $region4: #{tpu_custom_call.1} parent=0 // pred_region
    _
  $region5: #{tpu_custom_call.1} parent=0 // pred_fallthru
    _
  // Predicated region
  $region6: #{tpu_custom_call.1} parent=0 // pred_check
    _
  $region7: #{tpu_custom_call.1} parent=0 // pred_check_branch
    %15 = sbr.rel (0) target = $region9
  $region8: #{tpu_custom_call.1} parent=0 // pred_region
    _
  $region9: #{tpu_custom_call.1} parent=0 // pred_fallthru
    _
  // Predicated region
  $region10: #{tpu_custom_call.1} parent=0 // pred_check
    _
  $region11: #{tpu_custom_call.1} parent=0 // pred_check_branch
    %17 = sbr.rel (0) target = $region13
  $region12: #{tpu_custom_call.1} parent=0 // pred_region
    _
  $region13: #{tpu_custom_call.1} parent=0 // pred_fallthru
    _
  // Predicated region
  $region14: #{tpu_custom_call.1} parent=0 // pred_check
    _
  $region15: #{tpu_custom_call.1} parent=0 // pred_check_branch
    %19 = sbr.rel (0) target = $region17
  $region16: #{tpu_custom_call.1} parent=0 // pred_region
    _
  $region17: #{tpu_custom_call.1} parent=0 // pred_fallthru
    _
  // Predicated region
  $region18: #{tpu_custom_call.1} parent=0 // pred_check
    _
  $region19: #{tpu_custom_call.1} parent=0 // pred_check_branch
    %21 = sbr.rel (0) target = $region21
  $region20: #{tpu_custom_call.1} parent=0 // pred_region
    _
  $region21: #{tpu_custom_call.1} parent=0 // pred_fallthru
    _
  // Predicated region
  $region22: #{tpu_custom_call.1} parent=0 // pred_check
    _
  $region23: #{tpu_custom_call.1} parent=0 // pred_check_branch
    %23 = sbr.rel (0) target = $region25
  $region24: #{tpu_custom_call.1} parent=0 // pred_region
    _
  $region25: #{tpu_custom_call.1} parent=0 // pred_fallthru
    _
  // Predicated region
  $region26: #{tpu_custom_call.1} parent=0 // pred_check
    _
  $region27: #{tpu_custom_call.1} parent=0 // pred_check_branch
    %25 = sbr.rel (0) target = $region29
  $region28: #{tpu_custom_call.1} parent=0 // pred_region
    _
  $region29: #{tpu_custom_call.1} parent=0 // pred_fallthru
    _
  %v26 = vld [vmem:[%s0] sm:$0xff]
  %v27 = vld [vmem:[%s1] sm:$0xff]
  %v28 = vld [vmem:[%s1 + $0x8] sm:$0xff]
  %v29 = vld [vmem:[%s1 + $0x10] sm:$0xff]
  %v30 = vld [vmem:[%s1 + $0x18] sm:$0xff]
  %v31 = vld [vmem:[%s2] sm:$0x1]
  %v33 = vlaneseq
  %v34 = vshrl.u32 %v33, 7
  %v35 = vsub.s32 0, %v34
  %v36 = vrot.slane %v31, %v35
  %vm38 = vcmask 261120
  %v40 = vsel %vm38, %v26, 0
  %42 = vmatprep.subr.mxu0 0.0
  %43 = vmatpush1.msra.mxu0 0.0
  %44 = vmatprep.subr.mxu0 0.0
  %45 = vmatpush1.msra.mxu0 0.0
  %46 = vmatprep.subr.mxu0 0.0
  %47 = vmatpush1.msra.mxu0 0.0
  %48 = vmatprep.subr.mxu0 0.0
  %49 = vmatpush1.msra.mxu0 0.0
  %50 = vmatprep.subr.mxu0 0.0
  %51 = vmatpush1.msra.mxu0 0.0
  %52 = vmatprep.subr.mxu0 0.0
  %53 = vmatpush1.msra.mxu0 0.0
  %54 = vmatprep.subr.mxu0 0.0
  %55 = vmatpush1.msra.mxu0 0.0
  %56 = vmatprep.subr.mxu0 0.0
  %57 = vmatpush1.msra.mxu0 0.0
  %58 = vmatprep.subr.mxu0 0.0
  %59 = vmatpush1.msra.mxu0 0.0
  %60 = vmatprep.subr.mxu0 0.0
  %61 = vmatpush1.msra.mxu0 0.0
  %62 = vmatprep.subr.mxu0 0.0
  %63 = vmatpush1.msra.mxu0 0.0
  %64 = vmatprep.subr.mxu0 0.0
  %65 = vmatpush1.msra.mxu0 0.0
  %66 = vmatprep.subr.mxu0 0.0
  %67 = vmatpush1.msra.mxu0 %v30
  %68 = vmatprep.subr.mxu0 0.0
  %69 = vmatpush1.msra.mxu0 %v29
  %70 = vmatprep.subr.mxu0 0.0
  %71 = vmatpush1.msra.mxu0 %v28
  %72 = vmatprep.subr.mxu0 0.0
  %73 = vmatpush1.msra.mxu0 %v27
  %74 = vmatprep.subr.mxu0 0.0
  %75 = vmatpush2.msra.mxu0 0.0
  %76 = vmatprep.subr.mxu0 0.0
  %77 = vmatpush2.msra.mxu0 0.0
  %78 = vmatprep.subr.mxu0 0.0
  %79 = vmatpush2.msra.mxu0 0.0
  %80 = vmatprep.subr.mxu0 0.0
  %81 = vmatpush2.msra.mxu0 0.0
  %82 = vmatprep.subr.mxu0 0.0
  %83 = vmatpush2.msra.mxu0 0.0
  %84 = vmatprep.subr.mxu0 0.0
  %85 = vmatpush2.msra.mxu0 0.0
  %86 = vmatprep.subr.mxu0 0.0
  %87 = vmatpush2.msra.mxu0 0.0
  %88 = vmatprep.subr.mxu0 0.0
  %89 = vmatpush2.msra.mxu0 0.0
  %90 = vmatprep.subr.mxu0 0.0
  %91 = vmatpush2.msra.mxu0 0.0
  %92 = vmatprep.subr.mxu0 0.0
  %93 = vmatpush2.msra.mxu0 0.0
  %94 = vmatprep.subr.mxu0 0.0
  %95 = vmatpush2.msra.mxu0 0.0
  %96 = vmatprep.subr.mxu0 0.0
  %97 = vmatpush2.msra.mxu0 0.0
  %98 = vmatprep.subr.mxu0 0.0
  %99 = vmatpush2.msra.mxu0 0.0
  %100 = vmatprep.subr.mxu0 0.0
  %101 = vmatpush2.msra.mxu0 0.0
  %102 = vmatprep.subr.mxu0 0.0
  %103 = vmatpush2.msra.mxu0 0.0
  %104 = vmatprep.subr.mxu0 0.0
  %105 = vmatpush2.msra.mxu0 0.0
  %106 = vmatprep.mubr.f32.mxu0 0.0
  %107 = vmatmul.mubr.f32.gmra.mxu0 %v40
  %v108 = vpop.f32.mrf.mxu0
  %v109 = vadd.f32 %v36, %v108
  %v110 = vpop.f32.mrf.mxu0
  %111 = vdwg.mxu0
  %v112 = vmax.f32 %v109, 0.0
  %v113 = vld [vmem:[%s3] sm:$0xff]
  %v114 = vld [vmem:[%s3 + $0x8] sm:$0xff]
  %v115 = vld [vmem:[%s4] sm:$0x1]
  %v117 = vlaneseq
  %v118 = vshrl.u32 %v117, 7
  %v119 = vsub.s32 0, %v118
  %v120 = vrot.slane %v115, %v119
  %vm122 = vcmask 130048
  %v124 = vsel %vm122, %v112, 0
  %126 = vmatprep.subr.mxu0 0.0
  %127 = vmatpush1.msra.mxu0 0.0
  %128 = vmatprep.subr.mxu0 0.0
  %129 = vmatpush1.msra.mxu0 0.0
  %130 = vmatprep.subr.mxu0 0.0
  %131 = vmatpush1.msra.mxu0 0.0
  %132 = vmatprep.subr.mxu0 0.0
  %133 = vmatpush1.msra.mxu0 0.0
  %134 = vmatprep.subr.mxu0 0.0
  %135 = vmatpush1.msra.mxu0 0.0
  %136 = vmatprep.subr.mxu0 0.0
  %137 = vmatpush1.msra.mxu0 0.0
  %138 = vmatprep.subr.mxu0 0.0
  %139 = vmatpush1.msra.mxu0 0.0
  %140 = vmatprep.subr.mxu0 0.0
  %141 = vmatpush1.msra.mxu0 0.0
  %142 = vmatprep.subr.mxu0 0.0
  %143 = vmatpush1.msra.mxu0 0.0
  %144 = vmatprep.subr.mxu0 0.0
  %145 = vmatpush1.msra.mxu0 0.0
  %146 = vmatprep.subr.mxu0 0.0
  %147 = vmatpush1.msra.mxu0 0.0
  %148 = vmatprep.subr.mxu0 0.0
  %149 = vmatpush1.msra.mxu0 0.0
  %150 = vmatprep.subr.mxu0 0.0
  %151 = vmatpush1.msra.mxu0 0.0
  %152 = vmatprep.subr.mxu0 0.0
  %153 = vmatpush1.msra.mxu0 0.0
  %154 = vmatprep.subr.mxu0 0.0
  %155 = vmatpush1.msra.mxu0 %v114
  %156 = vmatprep.subr.mxu0 0.0
  %157 = vmatpush1.msra.mxu0 %v113
  %158 = vmatprep.subr.mxu0 0.0
  %159 = vmatpush2.msra.mxu0 0.0
  %160 = vmatprep.subr.mxu0 0.0
  %161 = vmatpush2.msra.mxu0 0.0
  %162 = vmatprep.subr.mxu0 0.0
  %163 = vmatpush2.msra.mxu0 0.0
  %164 = vmatprep.subr.mxu0 0.0
  %165 = vmatpush2.msra.mxu0 0.0
  %166 = vmatprep.subr.mxu0 0.0
  %167 = vmatpush2.msra.mxu0 0.0
  %168 = vmatprep.subr.mxu0 0.0
  %169 = vmatpush2.msra.mxu0 0.0
  %170 = vmatprep.subr.mxu0 0.0
  %171 = vmatpush2.msra.mxu0 0.0
  %172 = vmatprep.subr.mxu0 0.0
  %173 = vmatpush2.msra.mxu0 0.0
  %174 = vmatprep.subr.mxu0 0.0
  %175 = vmatpush2.msra.mxu0 0.0
  %176 = vmatprep.subr.mxu0 0.0
  %177 = vmatpush2.msra.mxu0 0.0
  %178 = vmatprep.subr.mxu0 0.0
  %179 = vmatpush2.msra.mxu0 0.0
  %180 = vmatprep.subr.mxu0 0.0
  %181 = vmatpush2.msra.mxu0 0.0
  %182 = vmatprep.subr.mxu0 0.0
  %183 = vmatpush2.msra.mxu0 0.0
  %184 = vmatprep.subr.mxu0 0.0
  %185 = vmatpush2.msra.mxu0 0.0
  %186 = vmatprep.subr.mxu0 0.0
  %187 = vmatpush2.msra.mxu0 0.0
  %188 = vmatprep.subr.mxu0 0.0
  %189 = vmatpush2.msra.mxu0 0.0
  %190 = vmatprep.mubr.f32.mxu0 0.0
  %191 = vmatmul.mubr.f32.gmra.mxu0 %v124
  %v192 = vpop.f32.mrf.mxu0
  %v193 = vadd.f32 %v120, %v192
  %v194 = vpop.f32.mrf.mxu0
  %195 = vdwg.mxu0
  %v196 = vmax.f32 %v193, 0.0
  %v197 = vld [vmem:[%s5] sm:$0xff]
  %v198 = vld [vmem:[%s5 + $0x8] sm:$0xff]
  %v199 = vld [vmem:[%s6] sm:$0x1]
  %v201 = vlaneseq
  %v202 = vshrl.u32 %v201, 7
  %v203 = vsub.s32 0, %v202
  %v204 = vrot.slane %v199, %v203
  %v207 = vsel %vm122, %v196, 0
  %209 = vmatprep.subr.mxu0 0.0
  %210 = vmatpush1.msra.mxu0 0.0
  %211 = vmatprep.subr.mxu0 0.0
  %212 = vmatpush1.msra.mxu0 0.0
  %213 = vmatprep.subr.mxu0 0.0
  %214 = vmatpush1.msra.mxu0 0.0
  %215 = vmatprep.subr.mxu0 0.0
  %216 = vmatpush1.msra.mxu0 0.0
  %217 = vmatprep.subr.mxu0 0.0
  %218 = vmatpush1.msra.mxu0 0.0
  %219 = vmatprep.subr.mxu0 0.0
  %220 = vmatpush1.msra.mxu0 0.0
  %221 = vmatprep.subr.mxu0 0.0
  %222 = vmatpush1.msra.mxu0 0.0
  %223 = vmatprep.subr.mxu0 0.0
  %224 = vmatpush1.msra.mxu0 0.0
  %225 = vmatprep.subr.mxu0 0.0
  %226 = vmatpush1.msra.mxu0 0.0
  %227 = vmatprep.subr.mxu0 0.0
  %228 = vmatpush1.msra.mxu0 0.0
  %229 = vmatprep.subr.mxu0 0.0
  %230 = vmatpush1.msra.mxu0 0.0
  %231 = vmatprep.subr.mxu0 0.0
  %232 = vmatpush1.msra.mxu0 0.0
  %233 = vmatprep.subr.mxu0 0.0
  %234 = vmatpush1.msra.mxu0 0.0
  %235 = vmatprep.subr.mxu0 0.0
  %236 = vmatpush1.msra.mxu0 0.0
  %237 = vmatprep.subr.mxu0 0.0
  %238 = vmatpush1.msra.mxu0 %v198
  %239 = vmatprep.subr.mxu0 0.0
  %240 = vmatpush1.msra.mxu0 %v197
  %241 = vmatprep.subr.mxu0 0.0
  %242 = vmatpush2.msra.mxu0 0.0
  %243 = vmatprep.subr.mxu0 0.0
  %244 = vmatpush2.msra.mxu0 0.0
  %245 = vmatprep.subr.mxu0 0.0
  %246 = vmatpush2.msra.mxu0 0.0
  %247 = vmatprep.subr.mxu0 0.0
  %248 = vmatpush2.msra.mxu0 0.0
  %249 = vmatprep.subr.mxu0 0.0
  %250 = vmatpush2.msra.mxu0 0.0
  %251 = vmatprep.subr.mxu0 0.0
  %252 = vmatpush2.msra.mxu0 0.0
  %253 = vmatprep.subr.mxu0 0.0
  %254 = vmatpush2.msra.mxu0 0.0
  %255 = vmatprep.subr.mxu0 0.0
  %256 = vmatpush2.msra.mxu0 0.0
  %257 = vmatprep.subr.mxu0 0.0
  %258 = vmatpush2.msra.mxu0 0.0
  %259 = vmatprep.subr.mxu0 0.0
  %260 = vmatpush2.msra.mxu0 0.0
  %261 = vmatprep.subr.mxu0 0.0
  %262 = vmatpush2.msra.mxu0 0.0
  %263 = vmatprep.subr.mxu0 0.0
  %264 = vmatpush2.msra.mxu0 0.0
  %265 = vmatprep.subr.mxu0 0.0
  %266 = vmatpush2.msra.mxu0 0.0
  %267 = vmatprep.subr.mxu0 0.0
  %268 = vmatpush2.msra.mxu0 0.0
  %269 = vmatprep.subr.mxu0 0.0
  %270 = vmatpush2.msra.mxu0 0.0
  %271 = vmatprep.subr.mxu0 0.0
  %272 = vmatpush2.msra.mxu0 0.0
  %273 = vmatprep.mubr.f32.mxu0 0.0
  %274 = vmatmul.mubr.f32.gmra.mxu0 %v207
  %v275 = vpop.f32.mrf.mxu0
  %v276 = vadd.f32 %v204, %v275
  %v277 = vpop.f32.mrf.mxu0
  %278 = vdwg.mxu0
  %v279 = vxor.u32 %v276, 2147483648
  %v280 = vmul.f32 %v279, 1.442695
  %v281 = vpow.pop %v280
  %v282 = vadd.f32 %v281, 1.0
  %v283 = vrcp.pop %v282
  %v284 = vmul.f32 1.0, %v283
  %vm285 = vcmask 31744
  %286 = vst.msk [vmem:[%s7] sm:$0xff] %vm285, %v284
  // Predicated region
  $region30: #{tpu_custom_call.1} parent=0 // pred_check
    _
  $region31: #{tpu_custom_call.1} parent=0 // pred_check_branch
    %288 = sbr.rel (0) target = $region33
  $region32: #{tpu_custom_call.1} parent=0 // pred_region
    _
  $region33: #{tpu_custom_call.1} parent=0 // pred_fallthru
    _
  // Predicated region
  $region34: #{tpu_custom_call.1} parent=0 // pred_check
    _
  $region35: #{tpu_custom_call.1} parent=0 // pred_check_branch
    %290 = sbr.rel (0) target = $region37
  $region36: #{tpu_custom_call.1} parent=0 // pred_region
    _
  $region37: #{tpu_custom_call.1} parent=0 // pred_fallthru
    _

</llo_original>
